<compile_context>
chip_gen: v6e
topology: v6e:2x2x1
jax: 0.10.0
libtpu: 0.0.40
codegen_flags: <defaults>
</compile_context>

<pallas_src>
import jax
import jax.numpy as jnp
from jax.experimental import pallas as pl
from jax.experimental.pallas import tpu as pltpu


def _round_up(n, m):
    return ((n + m - 1) // m) * m


def rhythmnet_kernel(x_ref, w1_ref, b1_ref, w2_ref, b2_ref, o_ref):
    # In-kernel cast of x to the compute dtype (free VPU work, keeps the x DMA
    # in its native dtype and avoids a separate XLA astype pass over HBM).
    x = x_ref[...].astype(w1_ref.dtype)
    # fc1: [TB, in] @ [in, hidden] -> f32 accumulate.
    h = jnp.dot(x, w1_ref[...], preferred_element_type=jnp.float32)
    h = jnp.maximum(h + b1_ref[...], 0.0)   # bias + ReLU kept in f32 (v5e-safe)
    # dropout (eval mode) -> identity
    # fc2: [TB, hidden] @ [hidden, out] -> f32 accumulate.
    out = jnp.dot(h.astype(w2_ref.dtype), w2_ref[...],
                  preferred_element_type=jnp.float32)
    o_ref[...] = (out + b2_ref[...]).astype(o_ref.dtype)


def rhythmnet_forward(x, w1, b1, w2, b2, *, block_b=4096,
                      compute_dtype=None, out_dtype=None):
    """x: [B, in]; w1: [in, hidden]; b1: [1, hidden];
    w2: [hidden, out]; b2: [1, out] -> [B, out].

    compute_dtype: optional dtype for x/w1/w2 on the MXU (e.g. jnp.bfloat16 on
      v6e/v7x).  Accumulation, biases and the ReLU epilogue stay float32.
    out_dtype: dtype of the returned array (defaults to x.dtype).  Pass
      jnp.bfloat16 when downstream is bf16 to halve the dominant HBM write.
    """
    B, in_features = x.shape
    hidden = w1.shape[1]
    out_features = w2.shape[1]

    cdt = jnp.dtype(compute_dtype) if compute_dtype is not None else jnp.dtype(x.dtype)
    odt = jnp.dtype(out_dtype) if out_dtype is not None else jnp.dtype(x.dtype)
    sublane = 16 if cdt == jnp.dtype(jnp.bfloat16) else 8

    # Batch tile: multiple of the sublane count, capped at block_b and at the
    # rounded-up batch.  Prefer >= 2 grid steps when the batch allows so both
    # v7x TensorCores get work and the DMA pipeline can overlap.
    tb = min(_round_up(block_b, sublane), _round_up(B, sublane))
    if pl.cdiv(B, tb) < 2 and B >= 2 * sublane:
        tb = _round_up(pl.cdiv(B, 2), sublane)
    grid = (pl.cdiv(B, tb),)

    # Weights / biases are tiny; cast them once in the wrapper.  They stay
    # resident in VMEM across all batch tiles (constant index_map).
    w1_c = w1.astype(cdt)
    w2_c = w2.astype(cdt)
    b1_f = b1.astype(jnp.float32).reshape(1, hidden)
    b2_f = b2.astype(jnp.float32).reshape(1, out_features)

    # Scoped-VMEM budget from lane-padded tile footprints (double-buffered x
    # and out tiles dominate; weights are a few KiB).
    lane = 128
    x_buf = tb * _round_up(in_features, lane) * jnp.dtype(x.dtype).itemsize
    o_buf = tb * _round_up(out_features, lane) * odt.itemsize
    vmem_limit = int(min(max(2 * (x_buf + o_buf) + (8 << 20), 16 << 20), 48 << 20))

    flops = 2 * B * (in_features * hidden + hidden * out_features)
    bytes_accessed = (B * in_features * jnp.dtype(x.dtype).itemsize
                      + B * out_features * odt.itemsize
                      + (in_features * hidden + hidden * out_features) * cdt.itemsize
                      + (hidden + out_features) * 4)

    return pl.pallas_call(
        rhythmnet_kernel,
        out_shape=jax.ShapeDtypeStruct((B, out_features), odt),
        grid_spec=pltpu.PrefetchScalarGridSpec(
            num_scalar_prefetch=0,
            grid=grid,
            in_specs=[
                # x: tiled over the batch axis, native dtype (cast in-kernel).
                pl.BlockSpec((tb, in_features), lambda i: (i, 0)),
                # weights / biases: full blocks, resident across all tiles.
                pl.BlockSpec((in_features, hidden), lambda i: (0, 0)),
                pl.BlockSpec((1, hidden), lambda i: (0, 0)),
                pl.BlockSpec((hidden, out_features), lambda i: (0, 0)),
                pl.BlockSpec((1, out_features), lambda i: (0, 0)),
            ],
            # True-width output (masked stores) in the final dtype: minimal HBM
            # write, no wrapper slice/astype pass.
            out_specs=pl.BlockSpec((tb, out_features), lambda i: (i, 0)),
        ),
        compiler_params=pltpu.CompilerParams(
            dimension_semantics=("parallel",),
            vmem_limit_bytes=vmem_limit),
        cost_estimate=pl.CostEstimate(
            flops=flops, transcendentals=0, bytes_accessed=bytes_accessed),
    )(x, w1_c, b1_f, w2_c, b2_f)


def init_params(key, input_size=3, hidden_size=16, output_size=10,
                dtype=jnp.float32):
    """Deterministic init mimicking PyTorch nn.Linear default
    (uniform(-1/sqrt(fan_in), 1/sqrt(fan_in)))."""
    k1, k2, k3, k4 = jax.random.split(key, 4)
    bound1 = 1.0 / (input_size ** 0.5)
    bound2 = 1.0 / (hidden_size ** 0.5)
    # stored as [in, out] (transpose of PyTorch's [out, in])
    w1 = jax.random.uniform(k1, (input_size, hidden_size), dtype,
                            minval=-bound1, maxval=bound1)
    b1 = jax.random.uniform(k2, (1, hidden_size), dtype,
                            minval=-bound1, maxval=bound1)
    w2 = jax.random.uniform(k3, (hidden_size, output_size), dtype,
                            minval=-bound2, maxval=bound2)
    b2 = jax.random.uniform(k4, (1, output_size), dtype,
                            minval=-bound2, maxval=bound2)
    return w1, b1, w2, b2


def _ref(x, w1, b1, w2, b2):
    return jnp.maximum(x @ w1 + b1, 0.0) @ w2 + b2


if __name__ == "__main__":
    key = jax.random.PRNGKey(0)
    k_params, k_x_small, k_x_big, k_x_rag = jax.random.split(key, 4)

    input_size, hidden_size, output_size = 3, 16, 10
    w1, b1, w2, b2 = init_params(k_params, input_size, hidden_size, output_size)

    # 1) Tiny batch (single tile).
    batch_small = 8
    x_s = jax.random.normal(k_x_small, (batch_small, input_size), jnp.float32)
    out_s = jax.block_until_ready(rhythmnet_forward(x_s, w1, b1, w2, b2))
    assert out_s.shape == (batch_small, output_size)
    assert out_s.dtype == jnp.float32
    assert jnp.allclose(out_s, _ref(x_s, w1, b1, w2, b2), atol=1e-5, rtol=1e-5)

    # 2) Larger batch exercising the parallel batch grid (>= 2 grid steps).
    batch_big = 2048
    x_b = jax.random.normal(k_x_big, (batch_big, input_size), jnp.float32)
    out_b = jax.block_until_ready(rhythmnet_forward(x_b, w1, b1, w2, b2))
    assert out_b.shape == (batch_big, output_size)
    assert jnp.allclose(out_b, _ref(x_b, w1, b1, w2, b2), atol=1e-4, rtol=1e-4)

    # 3) Ragged batch (not a multiple of the tile): masked boundary block,
    #    no wrapper-side padding.
    batch_rag = 1000
    x_r = jax.random.normal(k_x_rag, (batch_rag, input_size), jnp.float32)
    out_r = jax.block_until_ready(rhythmnet_forward(x_r, w1, b1, w2, b2))
    assert out_r.shape == (batch_rag, output_size)
    assert jnp.allclose(out_r, _ref(x_r, w1, b1, w2, b2), atol=1e-4, rtol=1e-4)

    # 4) bf16 compute path (v6e/v7x MXU-friendly) + bf16 output stream;
    #    f32 biases / epilogue / accumulation.
    out_bf = jax.block_until_ready(
        rhythmnet_forward(x_b, w1, b1, w2, b2,
                          compute_dtype=jnp.bfloat16, out_dtype=jnp.bfloat16))
    assert out_bf.shape == (batch_big, output_size)
    assert out_bf.dtype == jnp.bfloat16
    assert jnp.allclose(out_bf.astype(jnp.float32), _ref(x_b, w1, b1, w2, b2),
                        atol=5e-2, rtol=5e-2)

    print("KERNEL_OK")
</pallas_src>

<mosaic_0001>
module attributes {stable_mosaic.version = 11 : i64} {
  func.func @rhythmnet_kernel(%arg0: i32, %arg1: memref<8x3xf32, #tpu.memory_space<vmem>>, %arg2: memref<3x16xf32, #tpu.memory_space<vmem>>, %arg3: memref<1x16xf32, #tpu.memory_space<vmem>>, %arg4: memref<16x10xf32, #tpu.memory_space<vmem>>, %arg5: memref<1x10xf32, #tpu.memory_space<vmem>>, %arg6: memref<8x10xf32, #tpu.memory_space<vmem>>) attributes {dimension_semantics = [#tpu.dimension_semantics<parallel>], iteration_bounds = array<i64: 1>, scalar_prefetch = 0 : i64, scratch_operands = 0 : i64, tpu.core_type = #tpu.core_type<tc>, window_params = [{transform_indices = @transform_0, window_bounds = array<i64: 8, 3>}, {pipeline_mode = #tpu.pipeline_mode<synchronous>, transform_indices = @transform_1, window_bounds = array<i64: 3, 16>}, {pipeline_mode = #tpu.pipeline_mode<synchronous>, transform_indices = @transform_2, window_bounds = array<i64: 1, 16>}, {pipeline_mode = #tpu.pipeline_mode<synchronous>, transform_indices = @transform_3, window_bounds = array<i64: 16, 10>}, {pipeline_mode = #tpu.pipeline_mode<synchronous>, transform_indices = @transform_4, window_bounds = array<i64: 1, 10>}, {transform_indices = @transform_5, window_bounds = array<i64: 8, 10>}]} {
    %c0 = arith.constant 0 : index
    %c0_0 = arith.constant 0 : index
    %0 = vector.load %arg1[%c0, %c0_0] : memref<8x3xf32, #tpu.memory_space<vmem>>, vector<8x3xf32>
    %c0_1 = arith.constant 0 : index
    %c0_2 = arith.constant 0 : index
    %1 = vector.load %arg2[%c0_1, %c0_2] : memref<3x16xf32, #tpu.memory_space<vmem>>, vector<3x16xf32>
    %cst = arith.constant dense<0.000000e+00> : vector<8x16xf32>
    %2 = tpu.matmul %0, %1, %cst {dimension_numbers = #tpu.dot_dimension_numbers<[1], [0], [0], [1], [0, 0, 1, 1], [], []>} : vector<8x3xf32>, vector<3x16xf32>, vector<8x16xf32> -> vector<8x16xf32>
    %c0_3 = arith.constant 0 : index
    %c0_4 = arith.constant 0 : index
    %3 = vector.load %arg3[%c0_3, %c0_4] : memref<1x16xf32, #tpu.memory_space<vmem>>, vector<1x16xf32>
    %4 = vector.broadcast %3 : vector<1x16xf32> to vector<8x16xf32>
    %5 = arith.addf %2, %4 : vector<8x16xf32>
    %cst_5 = arith.constant 0.000000e+00 : f32
    %6 = vector.broadcast %cst_5 : f32 to vector<8x16xf32>
    %7 = arith.maximumf %5, %6 : vector<8x16xf32>
    %c0_6 = arith.constant 0 : index
    %c0_7 = arith.constant 0 : index
    %8 = vector.load %arg4[%c0_6, %c0_7] : memref<16x10xf32, #tpu.memory_space<vmem>>, vector<16x10xf32>
    %cst_8 = arith.constant dense<0.000000e+00> : vector<8x10xf32>
    %9 = tpu.matmul %7, %8, %cst_8 {dimension_numbers = #tpu.dot_dimension_numbers<[1], [0], [0], [1], [0, 0, 1, 1], [], []>} : vector<8x16xf32>, vector<16x10xf32>, vector<8x10xf32> -> vector<8x10xf32>
    %c0_9 = arith.constant 0 : index
    %c0_10 = arith.constant 0 : index
    %10 = vector.load %arg5[%c0_9, %c0_10] : memref<1x10xf32, #tpu.memory_space<vmem>>, vector<1x10xf32>
    %11 = vector.broadcast %10 : vector<1x10xf32> to vector<8x10xf32>
    %12 = arith.addf %9, %11 : vector<8x10xf32>
    %c0_11 = arith.constant 0 : index
    %c0_12 = arith.constant 0 : index
    %13 = vector.load %arg6[%c0_11, %c0_12] : memref<8x10xf32, #tpu.memory_space<vmem>>, vector<8x10xf32>
    tpu.vector_store %arg6[%c0_11, %c0_12], %12 {strides = array<i32>} : memref<8x10xf32, #tpu.memory_space<vmem>>, vector<8x10xf32>,
    return
  }
  func.func @transform_0(%arg0: i32) -> (i32, i32) {
    %c0_i32 = arith.constant 0 : i32
    %c0_i32_0 = arith.constant 0 : i32
    return %arg0, %c0_i32 : i32, i32
  }
  func.func @transform_1(%arg0: i32) -> (i32, i32) {
    %c0_i32 = arith.constant 0 : i32
    %c0_i32_0 = arith.constant 0 : i32
    %c0_i32_1 = arith.constant 0 : i32
    return %c0_i32, %c0_i32_0 : i32, i32
  }
  func.func @transform_2(%arg0: i32) -> (i32, i32) {
    %c0_i32 = arith.constant 0 : i32
    %c0_i32_0 = arith.constant 0 : i32
    %c0_i32_1 = arith.constant 0 : i32
    return %c0_i32, %c0_i32_0 : i32, i32
  }
  func.func @transform_3(%arg0: i32) -> (i32, i32) {
    %c0_i32 = arith.constant 0 : i32
    %c0_i32_0 = arith.constant 0 : i32
    %c0_i32_1 = arith.constant 0 : i32
    return %c0_i32, %c0_i32_0 : i32, i32
  }
  func.func @transform_4(%arg0: i32) -> (i32, i32) {
    %c0_i32 = arith.constant 0 : i32
    %c0_i32_0 = arith.constant 0 : i32
    %c0_i32_1 = arith.constant 0 : i32
    return %c0_i32, %c0_i32_0 : i32, i32
  }
  func.func @transform_5(%arg0: i32) -> (i32, i32) {
    %c0_i32 = arith.constant 0 : i32
    %c0_i32_0 = arith.constant 0 : i32
    return %arg0, %c0_i32 : i32, i32
  }
}

</mosaic_0001>

<llo_original>
// kernel: tpu_custom_call.1
$region0: #{tpu_custom_call.1}
  #allocation0 [shape = 'u32[]', space=smem, size = 0x4, offset = 0x4, fixed_abs, tag = 'smem constant byte address 0x4 - core index']
  #allocation1 [shape = 'u32[144,128]{1,0:T(1,128)}', space=vmem, size = 0x12000, scoped, tag = 'internal scratch']
  %s0 = inlined_call_operand.vmem [shape: f32[8,3], index: 0, kind: input, shape index: {}]
  %s1 = inlined_call_operand.hbm [shape: f32[3,16], index: 1, kind: input, shape index: {}]
  %s2 = inlined_call_operand.vmem [shape: f32[1,16], index: 2, kind: input, shape index: {}]
  %s3 = inlined_call_operand.vmem [shape: f32[16,10], index: 3, kind: input, shape index: {}]
  %s4 = inlined_call_operand.vmem [shape: f32[1,10], index: 4, kind: input, shape index: {}]
  %s5 = inlined_call_operand.hbm [shape: f32[8,10], index: 5, kind: output, shape index: {}]
  %s6 = sld [smem:[#allocation0]]
  $region34: #{tpu_custom_call.1} parent=0
    _
  %s8 = ssub.s32 1, %s6
  %s9 = scalar_select 0, %s8, %s6
  $region1: #{tpu_custom_call.1} parent=0
    #allocation2 [shape = 'u8[2048]{0}', space=vmem, size = 0x800, scoped, tag = 'input window, operand 1, single buffered']
    #allocation3 [shape = 's32[1]{0}', space=sflag, size = 0x4, scoped, tag = 'scoped memory for tpu_custom_call.1']
    #allocation4 [shape = 's32[1]{0}', space=sflag, size = 0x4, scoped, tag = 'scoped memory for tpu_custom_call.1']
    #allocation5 [shape = 'u8[4096]{0}', space=vmem, size = 0x1000, scoped, tag = 'output window, operand 0, single buffered']
    %10 = vsyncpa [#allocation3], 0
    %11 = vsyncpa [#allocation4], 0
    // Predicated region
    $region2: #{tpu_custom_call.1} parent=1 // pred_check
      _
    $region3: #{tpu_custom_call.1} parent=1 // pred_check_branch
      %13 = sbr.rel (0) target = $region5
    $region4: #{tpu_custom_call.1} parent=1 // pred_region
      _
    $region5: #{tpu_custom_call.1} parent=1 // pred_fallthru
      _
    // Predicated region
    $region6: #{tpu_custom_call.1} parent=1 // pred_check
      _
    $region7: #{tpu_custom_call.1} parent=1 // pred_check_branch
      %15 = sbr.rel (0) target = $region9
    $region8: #{tpu_custom_call.1} parent=1 // pred_region
      %s17 = ssub.s32 64, 64
      %18 = vsyncadd [#allocation3], %s17
      %s20 = sshll.u32 [#allocation2], 4
      %s21 = int_to_ptr.vmem [resolvable:$true] %s20
      %23 = dma.hbm_to_vmem [thread:$0]  %s1, 64, %s21, [#allocation3]
    $region9: #{tpu_custom_call.1} parent=1 // pred_fallthru
      _
    // Predicated region
    $region10: #{tpu_custom_call.1} parent=1 // pred_check
      _
    $region11: #{tpu_custom_call.1} parent=1 // pred_check_branch
      %25 = sbr.rel (0) target = $region13
    $region12: #{tpu_custom_call.1} parent=1 // pred_region
      _
    $region13: #{tpu_custom_call.1} parent=1 // pred_fallthru
      _
    // Predicated region
    $region14: #{tpu_custom_call.1} parent=1 // pred_check
      _
    $region15: #{tpu_custom_call.1} parent=1 // pred_check_branch
      %27 = sbr.rel (0) target = $region17
    $region16: #{tpu_custom_call.1} parent=1 // pred_region
      _
    $region17: #{tpu_custom_call.1} parent=1 // pred_fallthru
      _
    // Predicated region
    $region18: #{tpu_custom_call.1} parent=1 // pred_check
      _
    $region19: #{tpu_custom_call.1} parent=1 // pred_check_branch
      %29 = sbr.rel (0) target = $region21
    $region20: #{tpu_custom_call.1} parent=1 // pred_region
      _
    $region21: #{tpu_custom_call.1} parent=1 // pred_fallthru
      _
    // Predicated region
    $region22: #{tpu_custom_call.1} parent=1 // pred_check
      _
    $region23: #{tpu_custom_call.1} parent=1 // pred_check_branch
      %31 = sbr.rel (0) target = $region25
    $region24: #{tpu_custom_call.1} parent=1 // pred_region
      %32 = dma.done [#allocation3], 64
    $region25: #{tpu_custom_call.1} parent=1 // pred_fallthru
      _
    %v33 = vld [vmem:[%s0] sm:$0xff]
    %v34 = vld [vmem:[#allocation2] sm:$0x7]
    %v35 = vld [vmem:[%s2] sm:$0x1]
    %v37 = vlaneseq
    %v38 = vshrl.u32 %v37, 7
    %v39 = vsub.s32 0, %v38
    %v40 = vrot.slane %v35, %v39
    %vm42 = vcmask 23552
    %v44 = vsel %vm42, %v33, 0
    %vm46 = vcmask 1042432
    %v48 = vsel %vm46, %v34, 0
    %50 = vmatprep.subr.mxu0 0.0
    %51 = vmatpush1.msra.mxu0 0.0
    %52 = vmatprep.subr.mxu0 0.0
    %53 = vmatpush1.msra.mxu0 0.0
    %54 = vmatprep.subr.mxu0 0.0
    %55 = vmatpush1.msra.mxu0 0.0
    %56 = vmatprep.subr.mxu0 0.0
    %57 = vmatpush1.msra.mxu0 0.0
    %58 = vmatprep.subr.mxu0 0.0
    %59 = vmatpush1.msra.mxu0 0.0
    %60 = vmatprep.subr.mxu0 0.0
    %61 = vmatpush1.msra.mxu0 0.0
    %62 = vmatprep.subr.mxu0 0.0
    %63 = vmatpush1.msra.mxu0 0.0
    %64 = vmatprep.subr.mxu0 0.0
    %65 = vmatpush1.msra.mxu0 0.0
    %66 = vmatprep.subr.mxu0 0.0
    %67 = vmatpush1.msra.mxu0 0.0
    %68 = vmatprep.subr.mxu0 0.0
    %69 = vmatpush1.msra.mxu0 0.0
    %70 = vmatprep.subr.mxu0 0.0
    %71 = vmatpush1.msra.mxu0 0.0
    %72 = vmatprep.subr.mxu0 0.0
    %73 = vmatpush1.msra.mxu0 0.0
    %74 = vmatprep.subr.mxu0 0.0
    %75 = vmatpush1.msra.mxu0 0.0
    %76 = vmatprep.subr.mxu0 0.0
    %77 = vmatpush1.msra.mxu0 0.0
    %78 = vmatprep.subr.mxu0 0.0
    %79 = vmatpush1.msra.mxu0 0.0
    %80 = vmatprep.subr.mxu0 0.0
    %81 = vmatpush1.msra.mxu0 %v48
    %82 = vmatprep.subr.mxu0 0.0
    %83 = vmatpush2.msra.mxu0 0.0
    %84 = vmatprep.subr.mxu0 0.0
    %85 = vmatpush2.msra.mxu0 0.0
    %86 = vmatprep.subr.mxu0 0.0
    %87 = vmatpush2.msra.mxu0 0.0
    %88 = vmatprep.subr.mxu0 0.0
    %89 = vmatpush2.msra.mxu0 0.0
    %90 = vmatprep.subr.mxu0 0.0
    %91 = vmatpush2.msra.mxu0 0.0
    %92 = vmatprep.subr.mxu0 0.0
    %93 = vmatpush2.msra.mxu0 0.0
    %94 = vmatprep.subr.mxu0 0.0
    %95 = vmatpush2.msra.mxu0 0.0
    %96 = vmatprep.subr.mxu0 0.0
    %97 = vmatpush2.msra.mxu0 0.0
    %98 = vmatprep.subr.mxu0 0.0
    %99 = vmatpush2.msra.mxu0 0.0
    %100 = vmatprep.subr.mxu0 0.0
    %101 = vmatpush2.msra.mxu0 0.0
    %102 = vmatprep.subr.mxu0 0.0
    %103 = vmatpush2.msra.mxu0 0.0
    %104 = vmatprep.subr.mxu0 0.0
    %105 = vmatpush2.msra.mxu0 0.0
    %106 = vmatprep.subr.mxu0 0.0
    %107 = vmatpush2.msra.mxu0 0.0
    %108 = vmatprep.subr.mxu0 0.0
    %109 = vmatpush2.msra.mxu0 0.0
    %110 = vmatprep.subr.mxu0 0.0
    %111 = vmatpush2.msra.mxu0 0.0
    %112 = vmatprep.subr.mxu0 0.0
    %113 = vmatpush2.msra.mxu0 0.0
    %114 = vmatprep.mubr.f32.mxu0 0.0
    %115 = vmatmul.mubr.f32.gmra.mxu0 %v44
    %v116 = vpop.f32.mrf.mxu0
    %v117 = vadd.f32 %v40, %v116
    %v118 = vpop.f32.mrf.mxu0
    %119 = vdwg.mxu0
    %v120 = vmax.f32 %v117, 0.0
    %v121 = vld [vmem:[%s3] sm:$0xff]
    %v122 = vld [vmem:[%s3 + $0x8] sm:$0xff]
    %v123 = vld [vmem:[%s4] sm:$0x1]
    %v125 = vlaneseq
    %v126 = vshrl.u32 %v125, 7
    %v127 = vsub.s32 0, %v126
    %v128 = vrot.slane %v123, %v127
    %vm130 = vcmask 130048
    %v132 = vsel %vm130, %v120, 0
    %134 = vmatprep.subr.mxu0 0.0
    %135 = vmatpush1.msra.mxu0 0.0
    %136 = vmatprep.subr.mxu0 0.0
    %137 = vmatpush1.msra.mxu0 0.0
    %138 = vmatprep.subr.mxu0 0.0
    %139 = vmatpush1.msra.mxu0 0.0
    %140 = vmatprep.subr.mxu0 0.0
    %141 = vmatpush1.msra.mxu0 0.0
    %142 = vmatprep.subr.mxu0 0.0
    %143 = vmatpush1.msra.mxu0 0.0
    %144 = vmatprep.subr.mxu0 0.0
    %145 = vmatpush1.msra.mxu0 0.0
    %146 = vmatprep.subr.mxu0 0.0
    %147 = vmatpush1.msra.mxu0 0.0
    %148 = vmatprep.subr.mxu0 0.0
    %149 = vmatpush1.msra.mxu0 0.0
    %150 = vmatprep.subr.mxu0 0.0
    %151 = vmatpush1.msra.mxu0 0.0
    %152 = vmatprep.subr.mxu0 0.0
    %153 = vmatpush1.msra.mxu0 0.0
    %154 = vmatprep.subr.mxu0 0.0
    %155 = vmatpush1.msra.mxu0 0.0
    %156 = vmatprep.subr.mxu0 0.0
    %157 = vmatpush1.msra.mxu0 0.0
    %158 = vmatprep.subr.mxu0 0.0
    %159 = vmatpush1.msra.mxu0 0.0
    %160 = vmatprep.subr.mxu0 0.0
    %161 = vmatpush1.msra.mxu0 0.0
    %162 = vmatprep.subr.mxu0 0.0
    %163 = vmatpush1.msra.mxu0 %v122
    %164 = vmatprep.subr.mxu0 0.0
    %165 = vmatpush1.msra.mxu0 %v121
    %166 = vmatprep.subr.mxu0 0.0
    %167 = vmatpush2.msra.mxu0 0.0
    %168 = vmatprep.subr.mxu0 0.0
    %169 = vmatpush2.msra.mxu0 0.0
    %170 = vmatprep.subr.mxu0 0.0
    %171 = vmatpush2.msra.mxu0 0.0
    %172 = vmatprep.subr.mxu0 0.0
    %173 = vmatpush2.msra.mxu0 0.0
    %174 = vmatprep.subr.mxu0 0.0
    %175 = vmatpush2.msra.mxu0 0.0
    %176 = vmatprep.subr.mxu0 0.0
    %177 = vmatpush2.msra.mxu0 0.0
    %178 = vmatprep.subr.mxu0 0.0
    %179 = vmatpush2.msra.mxu0 0.0
    %180 = vmatprep.subr.mxu0 0.0
    %181 = vmatpush2.msra.mxu0 0.0
    %182 = vmatprep.subr.mxu0 0.0
    %183 = vmatpush2.msra.mxu0 0.0
    %184 = vmatprep.subr.mxu0 0.0
    %185 = vmatpush2.msra.mxu0 0.0
    %186 = vmatprep.subr.mxu0 0.0
    %187 = vmatpush2.msra.mxu0 0.0
    %188 = vmatprep.subr.mxu0 0.0
    %189 = vmatpush2.msra.mxu0 0.0
    %190 = vmatprep.subr.mxu0 0.0
    %191 = vmatpush2.msra.mxu0 0.0
    %192 = vmatprep.subr.mxu0 0.0
    %193 = vmatpush2.msra.mxu0 0.0
    %194 = vmatprep.subr.mxu0 0.0
    %195 = vmatpush2.msra.mxu0 0.0
    %196 = vmatprep.subr.mxu0 0.0
    %197 = vmatpush2.msra.mxu0 0.0
    %198 = vmatprep.mubr.f32.mxu0 0.0
    %199 = vmatmul.mubr.f32.gmra.mxu0 %v132
    %v200 = vpop.f32.mrf.mxu0
    %v201 = vadd.f32 %v128, %v200
    %v202 = vpop.f32.mrf.mxu0
    %203 = vdwg.mxu0
    %vm204 = vcmask 80896
    %205 = vst.msk [vmem:[#allocation5] sm:$0xff] %vm204, %v201
    // Predicated region
    $region26: #{tpu_custom_call.1} parent=1 // pred_check
      _
    $region27: #{tpu_custom_call.1} parent=1 // pred_check_branch
      %207 = sbr.rel (0) target = $region29
    $region28: #{tpu_custom_call.1} parent=1 // pred_region
      %s209 = ssub.s32 128, 128
      %210 = vsyncadd [#allocation4], %s209
      %s212 = sshll.u32 [#allocation5], 4
      %s213 = int_to_ptr.vmem [resolvable:$true] %s212
      %215 = dma.vmem_to_hbm [thread:$0]  %s213, 128, %s5, [#allocation4]
    $region29: #{tpu_custom_call.1} parent=1 // pred_fallthru
      _
    // Predicated region
    $region30: #{tpu_custom_call.1} parent=1 // pred_check
      _
    $region31: #{tpu_custom_call.1} parent=1 // pred_check_branch
      %217 = sbr.rel (0) target = $region33
    $region32: #{tpu_custom_call.1} parent=1 // pred_region
      %218 = dma.done [#allocation4], 128
    $region33: #{tpu_custom_call.1} parent=1 // pred_fallthru
      _
    %219 = vsyncpa [#allocation3], 1
    %220 = vsyncpa [#allocation4], 1

</llo_original>
